<compile_context>
chip_gen: v6e
topology: v6e:2x2x1
jax: 0.10.0
libtpu: 0.0.40
codegen_flags: <defaults>
</compile_context>

<pallas_src>
import functools
import math

import jax
import jax.numpy as jnp
from jax.experimental import pallas as pl
from jax.experimental.pallas import tpu as pltpu

_VMEM_LIMIT = 64 * 1024 * 1024  # explicit scoped-VMEM budget (re-derive per chip)


# ----------------------------- helpers -----------------------------

def _pick(dim, target, align):
    """Largest `align`-multiple divisor of `dim` that is <= target, else full dim."""
    if dim <= target:
        return dim
    t = (target // align) * align
    while t >= align:
        if dim % t == 0:
            return t
        t -= align
    return dim


# ----------------------------- Pallas kernels -----------------------------

def _rms_matmul_kernel(x_ref, g_ref, w_ref, b_ref, o_ref, xn_sc, *, eps):
    # grid (row_tiles, col_tiles), col axis "arbitrary".
    # Normalize + cast the resident x row-tile once (j == 0), reuse for all j.
    @pl.when(pl.program_id(1) == 0)
    def _norm():
        xf = x_ref[...].astype(jnp.float32)
        ms = jnp.mean(xf * xf, axis=-1, keepdims=True)
        xn = xf * jax.lax.rsqrt(ms + eps) * g_ref[...].astype(jnp.float32)
        xn_sc[...] = xn.astype(xn_sc.dtype)

    acc = jnp.dot(xn_sc[...], w_ref[...], preferred_element_type=jnp.float32)
    o_ref[...] = (acc + b_ref[...].astype(jnp.float32)).astype(o_ref.dtype)


def _rms_matmul_normout_kernel(x_ref, g_ref, w_ref, b_ref, o_ref, hn_ref, xn_sc,
                               *, eps):
    # Same as above, but also emits the normalized bf16 activations (consumed by
    # the MoE kernels, so the pre-MoE norm is computed exactly once).
    @pl.when(pl.program_id(1) == 0)
    def _norm():
        xf = x_ref[...].astype(jnp.float32)
        ms = jnp.mean(xf * xf, axis=-1, keepdims=True)
        xn = xf * jax.lax.rsqrt(ms + eps) * g_ref[...].astype(jnp.float32)
        xn_sc[...] = xn.astype(xn_sc.dtype)
        hn_ref[...] = xn_sc[...]

    acc = jnp.dot(xn_sc[...], w_ref[...], preferred_element_type=jnp.float32)
    o_ref[...] = (acc + b_ref[...].astype(jnp.float32)).astype(o_ref.dtype)


def _matmul_bias_res_kernel(x_ref, w_ref, b_ref, r_ref, o_ref, acc_ref):
    # Tiled (M, N, K) with fp32 scratch accumulator; bias + residual fused.
    kk = pl.program_id(2)

    @pl.when(kk == 0)
    def _():
        acc_ref[...] = jnp.zeros_like(acc_ref)

    acc_ref[...] += jnp.dot(x_ref[...], w_ref[...],
                            preferred_element_type=jnp.float32)

    @pl.when(kk == pl.num_programs(2) - 1)
    def _():
        o_ref[...] = (acc_ref[...] + b_ref[...].astype(jnp.float32)
                      + r_ref[...].astype(jnp.float32)).astype(o_ref.dtype)


def _flash_attn_kernel(qn_ref, qp_ref, kn_ref, kp_ref, v_ref, o_ref,
                       m_sc, l_sc, acc_sc, *, tq, tkv):
    # grid: (B, nH, q_tiles, kv_tiles); kv axis last ("arbitrary").
    # Scale already folded into q; mask only on diagonal tiles (tq == tkv).
    qi = pl.program_id(2)
    ki = pl.program_id(3)

    @pl.when(ki == 0)
    def _init():
        m_sc[...] = jnp.full_like(m_sc, -1e30)
        l_sc[...] = jnp.zeros_like(l_sc)
        acc_sc[...] = jnp.zeros_like(acc_sc)

    def _scores():
        s = jax.lax.dot_general(qn_ref[0], kn_ref[0], (((1,), (1,)), ((), ())),
                                preferred_element_type=jnp.float32)
        s = s + jax.lax.dot_general(qp_ref[0, 0], kp_ref[0],
                                    (((1,), (1,)), ((), ())),
                                    preferred_element_type=jnp.float32)
        return s

    def _online_update(s):
        m_prev = m_sc[...]
        m_new = jnp.maximum(m_prev, jnp.max(s, axis=-1, keepdims=True))
        alpha = jnp.exp(m_prev - m_new)
        p = jnp.exp(s - m_new)
        l_sc[...] = alpha * l_sc[...] + jnp.sum(p, axis=-1, keepdims=True)
        acc_sc[...] = alpha * acc_sc[...] + jnp.dot(
            p.astype(v_ref.dtype), v_ref[0], preferred_element_type=jnp.float32)
        m_sc[...] = m_new

    @pl.when(ki < qi)            # fully-past tile: no mask needed
    def _past():
        _online_update(_scores())

    @pl.when(ki == qi)           # diagonal tile: causal mask
    def _diag():
        s = _scores()
        row = jax.lax.broadcasted_iota(jnp.int32, (tq, tkv), 0)
        col = jax.lax.broadcasted_iota(jnp.int32, (tq, tkv), 1)
        _online_update(jnp.where(col <= row, s, -1e30))

    @pl.when(ki == pl.num_programs(3) - 1)
    def _finalize():
        inv = pl.reciprocal(l_sc[...], approx=True)
        o_ref[...] = (acc_sc[...] * inv).astype(o_ref.dtype)


def _shared_swiglu_kernel(hn_ref, h_ref, wg_ref, wu_ref, wd_ref, o_ref, acc_ref):
    # grid (token_tiles, inter_tiles); residual fused into the accumulator init.
    ii = pl.program_id(1)

    @pl.when(ii == 0)
    def _init():
        acc_ref[...] = h_ref[...].astype(jnp.float32)          # residual

    hn = hn_ref[...]
    gt = jnp.dot(hn, wg_ref[...], preferred_element_type=jnp.float32)
    up = jnp.dot(hn, wu_ref[...], preferred_element_type=jnp.float32)
    act = (gt * jax.nn.sigmoid(gt) * up).astype(wd_ref.dtype)
    acc_ref[...] += jnp.dot(act, wd_ref[...], preferred_element_type=jnp.float32)

    @pl.when(ii == pl.num_programs(1) - 1)
    def _fin():
        o_ref[...] = acc_ref[...].astype(o_ref.dtype)


def _routed_moe_kernel(occ_ref, wsel_ref, hn_ref, base_ref, gate_ref,
                       wgu_ref, wd_ref, o_ref, acc_ref, *, inter):
    # grid (token_tiles ["parallel"], num_experts ["arbitrary"]).
    # base = residual + shared expert (fp32); experts with no routed token in
    # this tile are skipped (and their weight DMA elided via wsel aliasing).
    i = pl.program_id(0)
    e = pl.program_id(1)

    @pl.when(e == 0)
    def _init():
        acc_ref[...] = base_ref[...]

    @pl.when(occ_ref[i, e] > 0)
    def _expert():
        gu = jnp.dot(hn_ref[...], wgu_ref[0], preferred_element_type=jnp.float32)
        gt, up = gu[:, :inter], gu[:, inter:]
        act = gt * jax.nn.sigmoid(gt) * up
        dn = jnp.dot(act.astype(wd_ref.dtype), wd_ref[0],
                     preferred_element_type=jnp.float32)
        acc_ref[...] += gate_ref[0] * dn

    @pl.when(e == pl.num_programs(1) - 1)
    def _fin():
        o_ref[...] = acc_ref[...].astype(o_ref.dtype)


# ----------------------------- pallas_call wrappers -----------------------------

def rms_matmul(x, gamma, w, b, *, eps=1e-6, out_dtype=None, tm=256, tn=256):
    N, K = x.shape
    Dout = w.shape[1]
    out_dtype = out_dtype or x.dtype
    tm_, tn_ = _pick(N, tm, 8), _pick(Dout, tn, 128)
    grid = (N // tm_, Dout // tn_)
    return pl.pallas_call(
        functools.partial(_rms_matmul_kernel, eps=eps),
        out_shape=jax.ShapeDtypeStruct((N, Dout), out_dtype),
        grid=grid,
        in_specs=[pl.BlockSpec((tm_, K), lambda i, j: (i, 0)),
                  pl.BlockSpec((1, K), lambda i, j: (0, 0)),
                  pl.BlockSpec((K, tn_), lambda i, j: (0, j)),
                  pl.BlockSpec((1, tn_), lambda i, j: (0, j))],
        out_specs=pl.BlockSpec((tm_, tn_), lambda i, j: (i, j)),
        scratch_shapes=[pltpu.VMEM((tm_, K), jnp.bfloat16)],
        compiler_params=pltpu.CompilerParams(
            dimension_semantics=("parallel", "arbitrary"),
            vmem_limit_bytes=_VMEM_LIMIT),
    )(x, gamma.reshape(1, K), w, b.reshape(1, Dout))


def rms_matmul_norm_out(x, gamma, w, b, *, eps=1e-6, tm=256, tn=256):
    """Returns (x_norm @ w + b  [fp32],  x_norm [bf16])."""
    N, K = x.shape
    Dout = w.shape[1]
    tm_, tn_ = _pick(N, tm, 8), _pick(Dout, tn, 128)
    grid = (N // tm_, Dout // tn_)
    return pl.pallas_call(
        functools.partial(_rms_matmul_normout_kernel, eps=eps),
        out_shape=(jax.ShapeDtypeStruct((N, Dout), jnp.float32),
                   jax.ShapeDtypeStruct((N, K), jnp.bfloat16)),
        grid=grid,
        in_specs=[pl.BlockSpec((tm_, K), lambda i, j: (i, 0)),
                  pl.BlockSpec((1, K), lambda i, j: (0, 0)),
                  pl.BlockSpec((K, tn_), lambda i, j: (0, j)),
                  pl.BlockSpec((1, tn_), lambda i, j: (0, j))],
        out_specs=(pl.BlockSpec((tm_, tn_), lambda i, j: (i, j)),
                   pl.BlockSpec((tm_, K), lambda i, j: (i, 0))),
        scratch_shapes=[pltpu.VMEM((tm_, K), jnp.bfloat16)],
        compiler_params=pltpu.CompilerParams(
            dimension_semantics=("parallel", "arbitrary"),
            vmem_limit_bytes=_VMEM_LIMIT),
    )(x, gamma.reshape(1, K), w, b.reshape(1, Dout))


def matmul_bias_residual(x, w, b, resid, *, out_dtype, tm=256, tn=256, tk=512):
    N, K = x.shape
    Dout = w.shape[1]
    tm_, tn_, tk_ = _pick(N, tm, 8), _pick(Dout, tn, 128), _pick(K, tk, 128)
    grid = (N // tm_, Dout // tn_, K // tk_)
    return pl.pallas_call(
        _matmul_bias_res_kernel,
        out_shape=jax.ShapeDtypeStruct((N, Dout), out_dtype),
        grid=grid,
        in_specs=[pl.BlockSpec((tm_, tk_), lambda i, j, k: (i, k)),
                  pl.BlockSpec((tk_, tn_), lambda i, j, k: (k, j)),
                  pl.BlockSpec((1, tn_), lambda i, j, k: (0, j)),
                  pl.BlockSpec((tm_, tn_), lambda i, j, k: (i, j))],
        out_specs=pl.BlockSpec((tm_, tn_), lambda i, j, k: (i, j)),
        scratch_shapes=[pltpu.VMEM((tm_, tn_), jnp.float32)],
        compiler_params=pltpu.CompilerParams(
            dimension_semantics=("parallel", "parallel", "arbitrary"),
            vmem_limit_bytes=_VMEM_LIMIT),
    )(x, w, b.reshape(1, Dout), resid)


def flash_attention(q_nope, q_pe, k_nope, k_pe, v, *, num_heads, dn, dr, dv,
                    tile=256):
    # q_nope/k_nope: [B,S,nH*dn]; q_pe: [B,nH,S,dr]; k_pe (shared): [B,S,dr];
    # v: [B,S,nH*dv]; output written directly as [B*S, nH*dv].
    B, S, _ = q_nope.shape
    t = _pick(S, tile, 8)
    nq = S // t
    N = B * S
    grid = (B, num_heads, nq, nq)

    qn_map = lambda b, h, qi, ki: (b, qi, h)
    qp_map = lambda b, h, qi, ki: (b, h, qi, 0)
    kn_map = lambda b, h, qi, ki: (b, jnp.minimum(ki, qi), h)   # elide masked-tile DMA
    kp_map = lambda b, h, qi, ki: (b, jnp.minimum(ki, qi), 0)
    v_map = lambda b, h, qi, ki: (b, jnp.minimum(ki, qi), h)
    o_map = lambda b, h, qi, ki: (b * nq + qi, h)

    return pl.pallas_call(
        functools.partial(_flash_attn_kernel, tq=t, tkv=t),
        out_shape=jax.ShapeDtypeStruct((N, num_heads * dv), q_nope.dtype),
        grid=grid,
        in_specs=[pl.BlockSpec((1, t, dn), qn_map),
                  pl.BlockSpec((1, 1, t, dr), qp_map),
                  pl.BlockSpec((1, t, dn), kn_map),
                  pl.BlockSpec((1, t, dr), kp_map),
                  pl.BlockSpec((1, t, dv), v_map)],
        out_specs=pl.BlockSpec((t, dv), o_map),
        scratch_shapes=[pltpu.VMEM((t, 1), jnp.float32),
                        pltpu.VMEM((t, 1), jnp.float32),
                        pltpu.VMEM((t, dv), jnp.float32)],
        compiler_params=pltpu.CompilerParams(
            dimension_semantics=("parallel", "parallel", "parallel", "arbitrary"),
            vmem_limit_bytes=_VMEM_LIMIT),
    )(q_nope, q_pe, k_nope, k_pe, v)


def shared_expert(hn, h, wg, wu, wd, *, tm=256, ti=512):
    """fp32 (residual + shared SwiGLU expert), intermediate dim tiled."""
    N, H = hn.shape
    Is = wg.shape[1]
    tm_ = _pick(N, tm, 8)
    ti_ = _pick(Is, ti, 128)
    grid = (N // tm_, Is // ti_)
    return pl.pallas_call(
        _shared_swiglu_kernel,
        out_shape=jax.ShapeDtypeStruct((N, H), jnp.float32),
        grid=grid,
        in_specs=[pl.BlockSpec((tm_, H), lambda i, ii: (i, 0)),
                  pl.BlockSpec((tm_, H), lambda i, ii: (i, 0)),
                  pl.BlockSpec((H, ti_), lambda i, ii: (0, ii)),
                  pl.BlockSpec((H, ti_), lambda i, ii: (0, ii)),
                  pl.BlockSpec((ti_, H), lambda i, ii: (ii, 0))],
        out_specs=pl.BlockSpec((tm_, H), lambda i, ii: (i, 0)),
        scratch_shapes=[pltpu.VMEM((tm_, H), jnp.float32)],
        compiler_params=pltpu.CompilerParams(
            dimension_semantics=("parallel", "arbitrary"),
            vmem_limit_bytes=_VMEM_LIMIT),
    )(hn, h, wg, wu, wd)


def routed_experts(occ, wsel, hn, base, gates_e, wgu_e, wd_e, *, tm):
    N, H = hn.shape
    E, _, I2 = wgu_e.shape
    I = I2 // 2
    grid = (N // tm, E)
    return pl.pallas_call(
        functools.partial(_routed_moe_kernel, inter=I),
        out_shape=jax.ShapeDtypeStruct((N, H), jnp.float32),
        grid_spec=pltpu.PrefetchScalarGridSpec(
            num_scalar_prefetch=2,
            grid=grid,
            in_specs=[pl.BlockSpec((tm, H), lambda i, e, occ, ws: (i, 0)),
                      pl.BlockSpec((tm, H), lambda i, e, occ, ws: (i, 0)),
                      pl.BlockSpec((1, tm, 1), lambda i, e, occ, ws: (e, i, 0)),
                      # skipped experts alias the previously-loaded expert's
                      # weight block -> Pallas elides their DMA.
                      pl.BlockSpec((1, H, I2), lambda i, e, occ, ws: (ws[i, e], 0, 0)),
                      pl.BlockSpec((1, I, H), lambda i, e, occ, ws: (ws[i, e], 0, 0))],
            out_specs=pl.BlockSpec((tm, H), lambda i, e, occ, ws: (i, 0)),
            scratch_shapes=[pltpu.VMEM((tm, H), jnp.float32)]),
        compiler_params=pltpu.CompilerParams(
            dimension_semantics=("parallel", "arbitrary"),
            vmem_limit_bytes=_VMEM_LIMIT),
    )(occ, wsel, hn, base, gates_e, wgu_e, wd_e)


# ----------------------------- JAX glue -----------------------------

def apply_rope(x, cos, sin):
    # x: [B, S, nHead, d]; cos/sin: [S, d//2]; rotate-half layout.
    d2 = x.shape[-1] // 2
    x1, x2 = x[..., :d2], x[..., d2:]
    c = cos[None, :, None, :].astype(x.dtype)
    s = sin[None, :, None, :].astype(x.dtype)
    return jnp.concatenate([x1 * c - x2 * s, x1 * s + x2 * c], axis=-1)


def transformer_block_forward(params, x, cos, sin, cfg):
    B, S, H = x.shape
    nH, dn, dr, dv = cfg["num_heads"], cfg["qk_nope"], cfg["qk_rope"], cfg["v_head"]
    kvr = cfg["kv_lora_rank"]
    E = cfg["num_experts"]
    k_top = cfg["num_experts_per_token"]
    N = B * S

    x2d = x.reshape(N, H)
    x_bf = x2d.astype(jnp.bfloat16)                     # bf16 residual / matmul input
    scale = cfg["attention_scale_factor"] / math.sqrt(dn + dr)

    # ---------------- attention sub-block ----------------
    # fused pre-attn RMSNorm + (q-nope ++ q-rope ++ kv-a ++ k-rope) projection.
    qckv = rms_matmul(x_bf, params["pre_attn_norm_w"],
                      params["w_q_kva"], params["b_q_kva"],
                      out_dtype=jnp.bfloat16)
    o_qn, o_qr, o_ck = nH * dn, nH * (dn + dr), nH * (dn + dr) + kvr
    q_nope = (qckv[:, :o_qn] * scale).reshape(B, S, nH * dn)       # scale folded into q
    q_pe = qckv[:, o_qn:o_qr].reshape(B, S, nH, dr)
    c_kv = qckv[:, o_qr:o_ck]
    k_pe = qckv[:, o_ck:].reshape(B, S, 1, dr)

    q_pe = (apply_rope(q_pe, cos, sin) * scale).transpose(0, 2, 1, 3)  # [B,nH,S,dr] (small)
    k_pe = apply_rope(k_pe, cos, sin)[:, :, 0, :]                      # [B,S,dr], shared

    # fused kv-latent RMSNorm + kv-b up-projection ([k_nope | v] column layout).
    kv = rms_matmul(c_kv, params["kv_norm_w"], params["wkv_b"], params["bkv_b"],
                    out_dtype=jnp.bfloat16)
    k_nope = kv[:, :nH * dn].reshape(B, S, nH * dn)
    v = kv[:, nH * dn:].reshape(B, S, nH * dv)

    o2d = flash_attention(q_nope, q_pe, k_nope, k_pe, v,
                          num_heads=nH, dn=dn, dr=dr, dv=dv)           # [N, nH*dv]

    # output projection with bias + residual fused (hidden_dropout = 0.0 -> identity).
    h = matmul_bias_residual(o2d, params["wo"], params["bo"], x_bf,
                             out_dtype=jnp.bfloat16)

    # ---------------- MoE sub-block ----------------
    # router: fused pre-moe RMSNorm + router matmul; also emits normalized bf16 acts.
    logits, hn = rms_matmul_norm_out(h, params["pre_moe_norm_w"],
                                     params["w_router"], params["b_router"])
    probs = jax.nn.softmax(logits, axis=-1)
    topw, topi = jax.lax.top_k(probs, k_top)            # no renorm (matches ref TODO)
    hot = jax.nn.one_hot(topi, E, dtype=jnp.float32)
    gates = jnp.sum(hot * topw[..., None], axis=1)      # dense [N, E]
    gates_e = gates.T.reshape(E, N, 1)

    # shared expert (+ residual) in its own tiled kernel -> fp32 base.
    base = shared_expert(hn, h, params["w_sh_g"], params["w_sh_u"],
                         params["w_sh_down"])

    # per-(token_tile, expert) occupancy + weight-aliasing tables for DMA elision.
    tm_moe = _pick(N, 256, 8)
    T = N // tm_moe
    hits = (jnp.sum(hot, axis=1) > 0).reshape(T, tm_moe, E)
    occ = jnp.any(hits, axis=1).astype(jnp.int32)                       # [T, E]
    idx = jnp.broadcast_to(jnp.arange(E, dtype=jnp.int32)[None, :], occ.shape)
    act = occ > 0
    last = jax.lax.cummax(jnp.where(act, idx, -1), axis=1)
    first = jax.lax.cummin(jnp.where(act, idx, E), axis=1, reverse=True)
    wsel = jnp.where(last >= 0, last,
                     jnp.where(first < E, first, 0)).astype(jnp.int32)  # [T, E]

    out2d = routed_experts(occ, wsel, hn, base, gates_e,
                           params["w_exp_gu"], params["w_exp_down"], tm=tm_moe)
    return out2d.reshape(B, S, H)


def init_params(key, cfg):
    H, nH = cfg["hidden"], cfg["num_heads"]
    dn, dr, dv = cfg["qk_nope"], cfg["qk_rope"], cfg["v_head"]
    kvr = cfg["kv_lora_rank"]
    I, E = cfg["moe_intermediate"], cfg["num_experts"]
    Is = cfg["shared_intermediate"]
    ks = jax.random.split(key, 10)
    wf = lambda k, shp: (jax.random.normal(k, shp, jnp.float32) * 0.02
                         ).astype(jnp.bfloat16)          # bf16 matmul weights
    z = lambda n: jnp.zeros((n,), jnp.float32)
    dq_out = nH * dn + nH * dr + kvr + dr                # [q_nope|q_rope|c_kv|k_rope]
    return {
        "pre_attn_norm_w": jnp.ones((H,), jnp.float32),
        "w_q_kva": wf(ks[0], (H, dq_out)), "b_q_kva": z(dq_out),
        "kv_norm_w": jnp.ones((kvr,), jnp.float32),
        "wkv_b": wf(ks[1], (kvr, nH * (dn + dv))), "bkv_b": z(nH * (dn + dv)),
        "wo": wf(ks[2], (nH * dv, H)),             "bo": z(H),
        "pre_moe_norm_w": jnp.ones((H,), jnp.float32),
        "w_router": wf(ks[3], (H, E)),             "b_router": z(E),
        # per-expert gate/up concatenated -> one matmul per expert
        "w_exp_gu": wf(ks[4], (E, H, 2 * I)),
        "w_exp_down": wf(ks[5], (E, I, H)),
        # shared expert gate/up/down, tiled over the intermediate dim
        "w_sh_g": wf(ks[6], (H, Is)),
        "w_sh_u": wf(ks[7], (H, Is)),
        "w_sh_down": wf(ks[8], (Is, H)),
    }


if __name__ == "__main__":
    # Small batch/seq/hidden, but real per-head dims (128/64/128) so all matmul /
    # attention blocks are lane-aligned. shared_intermediate = 4 * moe_intermediate
    # as in the PyTorch constructor.
    cfg = dict(hidden=256, num_heads=2, qk_nope=128, qk_rope=64, v_head=128,
               kv_lora_rank=256, moe_intermediate=256, num_experts=8,
               num_experts_per_token=2, shared_intermediate=1024,
               attention_scale_factor=1.0)
    B, S = 2, 16

    key = jax.random.PRNGKey(0)
    k_x, k_p = jax.random.split(key)
    x = jax.random.normal(k_x, (B, S, cfg["hidden"]), jnp.float32)
    params = init_params(k_p, cfg)

    # RoPE tables (freqs_cis equivalent) for the rotate-half layout: [S, qk_rope//2].
    dr = cfg["qk_rope"]
    inv_freq = 1.0 / (10000.0 ** (jnp.arange(0, dr, 2, dtype=jnp.float32) / dr))
    ang = jnp.outer(jnp.arange(S, dtype=jnp.float32), inv_freq)
    cos, sin = jnp.cos(ang), jnp.sin(ang)

    out = transformer_block_forward(params, x, cos, sin, cfg)
    out = jax.block_until_ready(out)
    assert out.shape == (B, S, cfg["hidden"])
    assert bool(jnp.all(jnp.isfinite(out)))
    print("KERNEL_OK")
</pallas_src>

<mosaic_0001>
module attributes {stable_mosaic.version = 11 : i64} {
  func.func @_rms_matmul_kernel(%arg0: i32, %arg1: i32, %arg2: memref<32x256xbf16, #tpu.memory_space<vmem>>, %arg3: memref<1x256xf32, #tpu.memory_space<vmem>>, %arg4: memref<256x704xbf16, #tpu.memory_space<vmem>>, %arg5: memref<1x704xf32, #tpu.memory_space<vmem>>, %arg6: memref<32x704xbf16, #tpu.memory_space<vmem>>, %arg7: memref<32x256xbf16, #tpu.memory_space<vmem>>) attributes {dimension_semantics = [#tpu.dimension_semantics<parallel>, #tpu.dimension_semantics<arbitrary>], iteration_bounds = array<i64: 1, 1>, scalar_prefetch = 0 : i64, scratch_operands = 1 : i64, tpu.core_type = #tpu.core_type<tc>, window_params = [{transform_indices = @transform_0, window_bounds = array<i64: 32, 256>}, {pipeline_mode = #tpu.pipeline_mode<synchronous>, transform_indices = @transform_1, window_bounds = array<i64: 1, 256>}, {transform_indices = @transform_2, window_bounds = array<i64: 256, 704>}, {transform_indices = @transform_3, window_bounds = array<i64: 1, 704>}, {transform_indices = @transform_4, window_bounds = array<i64: 32, 704>}]} {
    %c0_i32 = arith.constant 0 : i32
    %0 = arith.cmpi eq, %arg1, %c0_i32 : i32
    %1 = arith.extui %0 : i1 to i32
    %c0_i32_0 = arith.constant 0 : i32
    %2 = arith.cmpi ne, %1, %c0_i32_0 : i32
    scf.if %2 {
      %c0_8 = arith.constant 0 : index
      %c0_9 = arith.constant 0 : index
      %11 = vector.load %arg2[%c0_8, %c0_9] : memref<32x256xbf16, #tpu.memory_space<vmem>>, vector<32x256xbf16>
      %12 = arith.extf %11 : vector<32x256xbf16> to vector<32x256xf32>
      %13 = arith.mulf %12, %12 : vector<32x256xf32>
      %cst_10 = arith.constant dense<0.000000e+00> : vector<32xf32>
      %14 = vector.multi_reduction <add>, %13, %cst_10 [1] : vector<32x256xf32> to vector<32xf32>
      %15 = vector.shape_cast %14 : vector<32xf32> to vector<32x1xf32>
      %cst_11 = arith.constant 2.560000e+02 : f32
      %16 = vector.broadcast %cst_11 : f32 to vector<32x1xf32>
      %17 = arith.divf %15, %16 : vector<32x1xf32>
      %cst_12 = arith.constant 9.99999997E-7 : f32
      %18 = vector.broadcast %cst_12 : f32 to vector<32x1xf32>
      %19 = arith.addf %17, %18 : vector<32x1xf32>
      %20 = math.rsqrt %19 : vector<32x1xf32>
      %21 = vector.broadcast %20 : vector<32x1xf32> to vector<32x256xf32>
      %22 = arith.mulf %12, %21 : vector<32x256xf32>
      %c0_13 = arith.constant 0 : index
      %c0_14 = arith.constant 0 : index
      %23 = vector.load %arg3[%c0_13, %c0_14] : memref<1x256xf32, #tpu.memory_space<vmem>>, vector<1x256xf32>
      %24 = vector.broadcast %23 : vector<1x256xf32> to vector<32x256xf32>
      %25 = arith.mulf %22, %24 : vector<32x256xf32>
      %26 = arith.truncf %25 : vector<32x256xf32> to vector<32x256xbf16>
      %c0_15 = arith.constant 0 : index
      %c0_16 = arith.constant 0 : index
      %27 = vector.load %arg7[%c0_15, %c0_16] : memref<32x256xbf16, #tpu.memory_space<vmem>>, vector<32x256xbf16>
      tpu.vector_store %arg7[%c0_15, %c0_16], %26 {strides = array<i32>} : memref<32x256xbf16, #tpu.memory_space<vmem>>, vector<32x256xbf16>,
    } else {
    }
    %c0 = arith.constant 0 : index
    %c0_1 = arith.constant 0 : index
    %3 = vector.load %arg7[%c0, %c0_1] : memref<32x256xbf16, #tpu.memory_space<vmem>>, vector<32x256xbf16>
    %c0_2 = arith.constant 0 : index
    %c0_3 = arith.constant 0 : index
    %4 = vector.load %arg4[%c0_2, %c0_3] : memref<256x704xbf16, #tpu.memory_space<vmem>>, vector<256x704xbf16>
    %cst = arith.constant dense<0.000000e+00> : vector<32x704xf32>
    %5 = tpu.matmul %3, %4, %cst {dimension_numbers = #tpu.dot_dimension_numbers<[1], [0], [0], [1], [0, 0, 1, 1], [], []>} : vector<32x256xbf16>, vector<256x704xbf16>, vector<32x704xf32> -> vector<32x704xf32>
    %c0_4 = arith.constant 0 : index
    %c0_5 = arith.constant 0 : index
    %6 = vector.load %arg5[%c0_4, %c0_5] : memref<1x704xf32, #tpu.memory_space<vmem>>, vector<1x704xf32>
    %7 = vector.broadcast %6 : vector<1x704xf32> to vector<32x704xf32>
    %8 = arith.addf %5, %7 : vector<32x704xf32>
    %9 = arith.truncf %8 : vector<32x704xf32> to vector<32x704xbf16>
    %c0_6 = arith.constant 0 : index
    %c0_7 = arith.constant 0 : index
    %10 = vector.load %arg6[%c0_6, %c0_7] : memref<32x704xbf16, #tpu.memory_space<vmem>>, vector<32x704xbf16>
    tpu.vector_store %arg6[%c0_6, %c0_7], %9 {strides = array<i32>} : memref<32x704xbf16, #tpu.memory_space<vmem>>, vector<32x704xbf16>,
    return
  }
  func.func @transform_0(%arg0: i32, %arg1: i32) -> (i32, i32) {
    %c0_i32 = arith.constant 0 : i32
    %c0_i32_0 = arith.constant 0 : i32
    return %arg0, %c0_i32 : i32, i32
  }
  func.func @transform_1(%arg0: i32, %arg1: i32) -> (i32, i32) {
    %c0_i32 = arith.constant 0 : i32
    %c0_i32_0 = arith.constant 0 : i32
    %c0_i32_1 = arith.constant 0 : i32
    return %c0_i32, %c0_i32_0 : i32, i32
  }
  func.func @transform_2(%arg0: i32, %arg1: i32) -> (i32, i32) {
    %c0_i32 = arith.constant 0 : i32
    %c0_i32_0 = arith.constant 0 : i32
    return %c0_i32, %arg1 : i32, i32
  }
  func.func @transform_3(%arg0: i32, %arg1: i32) -> (i32, i32) {
    %c0_i32 = arith.constant 0 : i32
    %c0_i32_0 = arith.constant 0 : i32
    return %c0_i32, %arg1 : i32, i32
  }
  func.func @transform_4(%arg0: i32, %arg1: i32) -> (i32, i32) {
    %c0_i32 = arith.constant 0 : i32
    return %arg0, %arg1 : i32, i32
  }
}

</mosaic_0001>

<llo_original>
// kernel: tpu_custom_call.1
$region0: #{tpu_custom_call.1}
  #allocation0 [shape = 'u32[]', space=smem, size = 0x4, offset = 0x4, fixed_abs, tag = 'smem constant byte address 0x4 - core index']
  #allocation1 [shape = 'u32[144,128]{1,0:T(1,128)}', space=vmem, size = 0x12000, scoped, tag = 'internal scratch']
  #allocation2 [shape = 'bf16[32,256]{1,0:T(8,128)(2,1)}', space=vmem, size = 0x4000, scoped, tag = 'scratch operand']
  %s0 = inlined_call_operand.vmem [shape: bf16[32,256], index: 0, kind: input, shape index: {}]
  %s1 = inlined_call_operand.vmem [shape: f32[1,256], index: 1, kind: input, shape index: {}]
  %s2 = inlined_call_operand.vmem [shape: bf16[256,704], index: 2, kind: input, shape index: {}]
  %s3 = inlined_call_operand.vmem [shape: f32[1,704], index: 3, kind: input, shape index: {}]
  %s4 = inlined_call_operand.hbm [shape: bf16[32,704], index: 4, kind: output, shape index: {}]
  %s5 = sld [smem:[#allocation0]]
  $region30: #{tpu_custom_call.1} parent=0
    _
  %s7 = ssub.s32 1, %s5
  %s8 = scalar_select 0, %s7, %s5
  $region1: #{tpu_custom_call.1} parent=0
    #allocation3 [shape = 'u8[49152]{0}', space=vmem, size = 0xc000, scoped, tag = 'output window, operand 0, single buffered']
    #allocation4 [shape = 's32[1]{0}', space=sflag, size = 0x4, scoped, tag = 'scoped memory for tpu_custom_call.1']
    %9 = vsyncpa [#allocation4], 0
    // Predicated region
    $region2: #{tpu_custom_call.1} parent=1 // pred_check
      _
    $region3: #{tpu_custom_call.1} parent=1 // pred_check_branch
      %11 = sbr.rel (0) target = $region5
    $region4: #{tpu_custom_call.1} parent=1 // pred_region
      _
    $region5: #{tpu_custom_call.1} parent=1 // pred_fallthru
      _
    // Predicated region
    $region6: #{tpu_custom_call.1} parent=1 // pred_check
      _
    $region7: #{tpu_custom_call.1} parent=1 // pred_check_branch
      %13 = sbr.rel (0) target = $region9
    $region8: #{tpu_custom_call.1} parent=1 // pred_region
      _
    $region9: #{tpu_custom_call.1} parent=1 // pred_fallthru
      _
    // Predicated region
    $region10: #{tpu_custom_call.1} parent=1 // pred_check
      _
    $region11: #{tpu_custom_call.1} parent=1 // pred_check_branch
      %15 = sbr.rel (0) target = $region13
    $region12: #{tpu_custom_call.1} parent=1 // pred_region
      _
    $region13: #{tpu_custom_call.1} parent=1 // pred_fallthru
      _
    // Predicated region
    $region14: #{tpu_custom_call.1} parent=1 // pred_check
      _
    $region15: #{tpu_custom_call.1} parent=1 // pred_check_branch
      %17 = sbr.rel (0) target = $region17
    $region16: #{tpu_custom_call.1} parent=1 // pred_region
      _
    $region17: #{tpu_custom_call.1} parent=1 // pred_fallthru
      _
    %p18 = scmp.eq.s32.totalorder 0, 0
    // Predicated region
    $region18: #{tpu_custom_call.1} parent=1 // pred_check
      %p19 = pneg %p18
    $region19: #{tpu_custom_call.1} parent=1 // pred_check_branch
      %21 = sbr.rel (%p19) target = $region21
    $region20: #{tpu_custom_call.1} parent=1 // pred_region
      %v22 = vld [vmem:[%s0] sm:$0xff]
      %v23 = vld [vmem:[%s0 + $0x8] sm:$0xff]
      %v24 = vld [vmem:[%s0 + $0x10] sm:$0xff]
      %v25 = vld [vmem:[%s0 + $0x18] sm:$0xff]
      %v26 = vunpack.c.l.bf16 %v22
      %v27 = vunpack.c.h.bf16 %v22
      %v28 = vunpack.c.l.bf16 %v23
      %v29 = vunpack.c.h.bf16 %v23
      %v30 = vunpack.c.l.bf16 %v24
      %v31 = vunpack.c.h.bf16 %v24
      %v32 = vunpack.c.l.bf16 %v25
      %v33 = vunpack.c.h.bf16 %v25
      %v34 = vmul.f32 %v26, %v26
      %v35 = vmul.f32 %v27, %v27
      %v36 = vmul.f32 %v28, %v28
      %v37 = vmul.f32 %v29, %v29
      %v38 = vmul.f32 %v30, %v30
      %v39 = vmul.f32 %v31, %v31
      %v40 = vmul.f32 %v32, %v32
      %v41 = vmul.f32 %v33, %v33
      %v42 = vadd.f32 %v34, %v35
      %43 = vadd.xlane.f32.xlu0 %v42
      %v44 = vpop.xlane.xlu0 %43
      %v45 = vadd.f32 %v36, %v37
      %46 = vadd.xlane.f32.xlu0 %v45
      %v47 = vpop.xlane.xlu0 %46
      %v48 = vadd.f32 %v38, %v39
      %49 = vadd.xlane.f32.xlu0 %v48
      %v50 = vpop.xlane.xlu0 %49
      %v51 = vadd.f32 %v40, %v41
      %52 = vadd.xlane.f32.xlu0 %v51
      %v53 = vpop.xlane.xlu0 %52
      %v54 = vrcp.pop 256.0
      %v55 = vmul.f32 %v44, %v54
      %v56 = vmul.f32 %v47, %v54
      %v57 = vmul.f32 %v50, %v54
      %v58 = vmul.f32 %v53, %v54
      %v59 = vadd.f32 %v55, 1e-06
      %v60 = vadd.f32 %v56, 1e-06
      %v61 = vadd.f32 %v57, 1e-06
      %v62 = vadd.f32 %v58, 1e-06
      %v63 = vrsqrt.pop %v59
      %v64 = vrsqrt.pop %v60
      %v65 = vrsqrt.pop %v61
      %v66 = vrsqrt.pop %v62
      %v67 = vmul.f32 %v26, %v63
      %v68 = vmul.f32 %v27, %v63
      %v69 = vmul.f32 %v28, %v64
      %v70 = vmul.f32 %v29, %v64
      %v71 = vmul.f32 %v30, %v65
      %v72 = vmul.f32 %v31, %v65
      %v73 = vmul.f32 %v32, %v66
      %v74 = vmul.f32 %v33, %v66
      %v75 = vld [vmem:[%s1] sm:$0x3]
      %v77 = vlaneseq
      %v78 = vshrl.u32 %v77, 7
      %v79 = vsub.s32 0, %v78
      %v80 = vrot.slane %v75, %v79
      %v81 = vlaneseq
      %v82 = vshrl.u32 %v81, 7
      %v83 = vsub.s32 1, %v82
      %v84 = vrot.slane %v75, %v83
      %v87 = vmul.f32 %v67, %v80
      %v88 = vmul.f32 %v68, %v84
      %v89 = vmul.f32 %v69, %v80
      %v90 = vmul.f32 %v70, %v84
      %v91 = vmul.f32 %v71, %v80
      %v92 = vmul.f32 %v72, %v84
      %v93 = vmul.f32 %v73, %v80
      %v94 = vmul.f32 %v74, %v84
      %v95 = vpack.c.bf16 %v89, %v87
      %v96 = vpack.c.bf16 %v90, %v88
      %v97 = vpack.c.bf16 %v93, %v91
      %v98 = vpack.c.bf16 %v94, %v92
      %v103 = vunpack.c.l.b16 %v95
      %v104 = vunpack.c.l.b16 %v96
      %v105 = vunpack.c.h.b16 %v95
      %v106 = vunpack.c.h.b16 %v96
      %v107 = vunpack.c.l.b16 %v97
      %v108 = vunpack.c.l.b16 %v98
      %v109 = vunpack.c.h.b16 %v97
      %v110 = vunpack.c.h.b16 %v98
      %v111 = vpack.c.b16 %v104, %v103
      %v112 = vpack.c.b16 %v106, %v105
      %v113 = vpack.c.b16 %v108, %v107
      %v114 = vpack.c.b16 %v110, %v109
      %119 = vst [vmem:[#allocation2] sm:$0xff] %v111
      %120 = vst [vmem:[#allocation2 + $0x8] sm:$0xff] %v112
      %121 = vst [vmem:[#allocation2 + $0x10] sm:$0xff] %v113
      %122 = vst [vmem:[#allocation2 + $0x18] sm:$0xff] %v114
    $region21: #{tpu_custom_call.1} parent=1 // pred_fallthru
      _
    %v123 = vld [vmem:[#allocation2] sm:$0xff]
    %v124 = vld [vmem:[#allocation2 + $0x8] sm:$0xff]
    %v125 = vld [vmem:[#allocation2 + $0x10] sm:$0xff]
    %v126 = vld [vmem:[#allocation2 + $0x18] sm:$0xff]
    %v127 = vld [vmem:[%s2] sm:$0xff]
    %v128 = vld [vmem:[%s2 + $0x8] sm:$0xff]
    %v129 = vld [vmem:[%s2 + $0x10] sm:$0xff]
    %v130 = vld [vmem:[%s2 + $0x18] sm:$0xff]
    %v131 = vld [vmem:[%s2 + $0x20] sm:$0xff]
    %v132 = vld [vmem:[%s2 + $0x28] sm:$0xff]
    %v133 = vld [vmem:[%s2 + $0x30] sm:$0xff]
    %v134 = vld [vmem:[%s2 + $0x38] sm:$0xff]
    %v135 = vld [vmem:[%s2 + $0x40] sm:$0xff]
    %v136 = vld [vmem:[%s2 + $0x48] sm:$0xff]
    %v137 = vld [vmem:[%s2 + $0x50] sm:$0xff]
    %v138 = vld [vmem:[%s2 + $0x58] sm:$0xff]
    %v139 = vld [vmem:[%s2 + $0x60] sm:$0xff]
    %v140 = vld [vmem:[%s2 + $0x68] sm:$0xff]
    %v141 = vld [vmem:[%s2 + $0x70] sm:$0xff]
    %v142 = vld [vmem:[%s2 + $0x78] sm:$0xff]
    %v143 = vld [vmem:[%s2 + $0x80] sm:$0xff]
    %v144 = vld [vmem:[%s2 + $0x88] sm:$0xff]
    %v145 = vld [vmem:[%s2 + $0x90] sm:$0xff]
    %v146 = vld [vmem:[%s2 + $0x98] sm:$0xff]
    %v147 = vld [vmem:[%s2 + $0xa0] sm:$0xff]
    %v148 = vld [vmem:[%s2 + $0xa8] sm:$0xff]
    %v149 = vld [vmem:[%s2 + $0xb0] sm:$0xff]
    %v150 = vld [vmem:[%s2 + $0xb8] sm:$0xff]
    %v151 = vld [vmem:[%s2 + $0xc0] sm:$0xff]
    %v152 = vld [vmem:[%s2 + $0xc8] sm:$0xff]
    %v153 = vld [vmem:[%s2 + $0xd0] sm:$0xff]
    %v154 = vld [vmem:[%s2 + $0xd8] sm:$0xff]
    %v155 = vld [vmem:[%s2 + $0xe0] sm:$0xff]
    %v156 = vld [vmem:[%s2 + $0xe8] sm:$0xff]
    %v157 = vld [vmem:[%s2 + $0xf0] sm:$0xff]
    %v158 = vld [vmem:[%s2 + $0xf8] sm:$0xff]
    %v159 = vld [vmem:[%s2 + $0x100] sm:$0xff]
    %v160 = vld [vmem:[%s2 + $0x108] sm:$0xff]
    %v161 = vld [vmem:[%s2 + $0x110] sm:$0xff]
    %v162 = vld [vmem:[%s2 + $0x118] sm:$0xff]
    %v163 = vld [vmem:[%s2 + $0x120] sm:$0xff]
    %v164 = vld [vmem:[%s2 + $0x128] sm:$0xff]
    %v165 = vld [vmem:[%s2 + $0x130] sm:$0xff]
    %v166 = vld [vmem:[%s2 + $0x138] sm:$0xff]
    %v167 = vld [vmem:[%s2 + $0x140] sm:$0xff]
    %v168 = vld [vmem:[%s2 + $0x148] sm:$0xff]
    %v169 = vld [vmem:[%s2 + $0x150] sm:$0xff]
    %v170 = vld [vmem:[%s2 + $0x158] sm:$0xff]
    %v171 = vld [vmem:[%s2 + $0x160] sm:$0xff]
    %v172 = vld [vmem:[%s2 + $0x168] sm:$0xff]
    %v173 = vld [vmem:[%s2 + $0x170] sm:$0xff]
    %v174 = vld [vmem:[%s2 + $0x178] sm:$0xff]
    %v175 = vld [vmem:[%s2 + $0x180] sm:$0xff]
    %v176 = vld [vmem:[%s2 + $0x188] sm:$0xff]
    %v177 = vld [vmem:[%s2 + $0x190] sm:$0xff]
    %v178 = vld [vmem:[%s2 + $0x198] sm:$0xff]
    %v179 = vld [vmem:[%s2 + $0x1a0] sm:$0xff]
    %v180 = vld [vmem:[%s2 + $0x1a8] sm:$0xff]
    %v181 = vld [vmem:[%s2 + $0x1b0] sm:$0xff]
    %v182 = vld [vmem:[%s2 + $0x1b8] sm:$0xff]
    %v183 = vld [vmem:[%s2 + $0x1c0] sm:$0xff]
    %v184 = vld [vmem:[%s2 + $0x1c8] sm:$0xff]
    %v185 = vld [vmem:[%s2 + $0x1d0] sm:$0xff]
    %v186 = vld [vmem:[%s2 + $0x1d8] sm:$0xff]
    %v187 = vld [vmem:[%s2 + $0x1e0] sm:$0xff]
    %v188 = vld [vmem:[%s2 + $0x1e8] sm:$0xff]
    %v189 = vld [vmem:[%s2 + $0x1f0] sm:$0xff]
    %v190 = vld [vmem:[%s2 + $0x1f8] sm:$0xff]
    %v191 = vld [vmem:[%s2 + $0x200] sm:$0xff]
    %v192 = vld [vmem:[%s2 + $0x208] sm:$0xff]
    %v193 = vld [vmem:[%s2 + $0x210] sm:$0xff]
    %v194 = vld [vmem:[%s2 + $0x218] sm:$0xff]
    %v195 = vld [vmem:[%s2 + $0x220] sm:$0xff]
    %v196 = vld [vmem:[%s2 + $0x228] sm:$0xff]
    %v197 = vld [vmem:[%s2 + $0x230] sm:$0xff]
    %v198 = vld [vmem:[%s2 + $0x238] sm:$0xff]
    %v199 = vld [vmem:[%s2 + $0x240] sm:$0xff]
    %v200 = vld [vmem:[%s2 + $0x248] sm:$0xff]
    %v201 = vld [vmem:[%s2 + $0x250] sm:$0xff]
    %v202 = vld [vmem:[%s2 + $0x258] sm:$0xff]
    %v203 = vld [vmem:[%s2 + $0x260] sm:$0xff]
    %v204 = vld [vmem:[%s2 + $0x268] sm:$0xff]
    %v205 = vld [vmem:[%s2 + $0x270] sm:$0xff]
    %v206 = vld [vmem:[%s2 + $0x278] sm:$0xff]
    %v207 = vld [vmem:[%s2 + $0x280] sm:$0xff]
    %v208 = vld [vmem:[%s2 + $0x288] sm:$0xff]
    %v209 = vld [vmem:[%s2 + $0x290] sm:$0xff]
    %v210 = vld [vmem:[%s2 + $0x298] sm:$0xff]
    %v211 = vld [vmem:[%s2 + $0x2a0] sm:$0xff]
    %v212 = vld [vmem:[%s2 + $0x2a8] sm:$0xff]
    %v213 = vld [vmem:[%s2 + $0x2b0] sm:$0xff]
    %v214 = vld [vmem:[%s2 + $0x2b8] sm:$0xff]
    %v215 = vld [vmem:[%s2 + $0x2c0] sm:$0xff]
    %v216 = vld [vmem:[%s2 + $0x2c8] sm:$0xff]
    %v217 = vld [vmem:[%s2 + $0x2d0] sm:$0xff]
    %v218 = vld [vmem:[%s2 + $0x2d8] sm:$0xff]
    %v219 = vld [vmem:[%s2 + $0x2e0] sm:$0xff]
    %v220 = vld [vmem:[%s2 + $0x2e8] sm:$0xff]
    %v221 = vld [vmem:[%s2 + $0x2f0] sm:$0xff]
    %v222 = vld [vmem:[%s2 + $0x2f8] sm:$0xff]
    %v223 = vld [vmem:[%s3] sm:$0x3f]
    %v225 = vlaneseq
    %v226 = vshrl.u32 %v225, 7
    %v227 = vsub.s32 0, %v226
    %v228 = vrot.slane %v223, %v227
    %v229 = vlaneseq
    %v230 = vshrl.u32 %v229, 7
    %v231 = vsub.s32 1, %v230
    %v232 = vrot.slane %v223, %v231
    %v233 = vlaneseq
    %v234 = vshrl.u32 %v233, 7
    %v235 = vsub.s32 2, %v234
    %v236 = vrot.slane %v223, %v235
    %v237 = vlaneseq
    %v238 = vshrl.u32 %v237, 7
    %v239 = vsub.s32 3, %v238
    %v240 = vrot.slane %v223, %v239
    %v241 = vlaneseq
    %v242 = vshrl.u32 %v241, 7
    %v243 = vsub.s32 4, %v242
    %v244 = vrot.slane %v223, %v243
    %v245 = vlaneseq
    %v246 = vshrl.u32 %v245, 7
    %v247 = vsub.s32 5, %v246
    %v248 = vrot.slane %v223, %v247
    %v259 = vunpack.c.l.b16 %v123
    %v260 = vunpack.c.h.b16 %v123
    %v261 = vunpack.c.l.b16 %v124
    %v262 = vunpack.c.h.b16 %v124
    %v263 = vunpack.c.l.b16 %v125
    %v264 = vunpack.c.h.b16 %v125
    %v265 = vunpack.c.l.b16 %v126
    %v266 = vunpack.c.h.b16 %v126
    %v267 = vpack.c.b16 %v261, %v259
    %v268 = vpack.c.b16 %v262, %v260
    %v269 = vpack.c.b16 %v265, %v263
    %v270 = vpack.c.b16 %v266, %v264
    %v371 = vunpack.c.l.b16 %v127
    %v372 = vunpack.c.h.b16 %v127
    %v373 = vunpack.c.l.b16 %v128
    %v374 = vunpack.c.h.b16 %v128
    %v375 = vunpack.c.l.b16 %v129
    %v376 = vunpack.c.h.b16 %v129
    %v377 = vunpack.c.l.b16 %v130
    %v378 = vunpack.c.h.b16 %v130
    %v379 = vunpack.c.l.b16 %v131
    %v380 = vunpack.c.h.b16 %v131
    %v381 = vunpack.c.l.b16 %v132
    %v382 = vunpack.c.h.b16 %v132
    %v383 = vunpack.c.l.b16 %v133
    %v384 = vunpack.c.h.b16 %v133
    %v385 = vunpack.c.l.b16 %v134
    %v386 = vunpack.c.h.b16 %v134
    %v387 = vunpack.c.l.b16 %v135
    %v388 = vunpack.c.h.b16 %v135
    %v389 = vunpack.c.l.b16 %v136
    %v390 = vunpack.c.h.b16 %v136
    %v391 = vunpack.c.l.b16 %v137
    %v392 = vunpack.c.h.b16 %v137
    %v393 = vunpack.c.l.b16 %v138
    %v394 = vunpack.c.h.b16 %v138
    %v395 = vunpack.c.l.b16 %v139
    %v396 = vunpack.c.h.b16 %v139
    %v397 = vunpack.c.l.b16 %v140
    %v398 = vunpack.c.h.b16 %v140
    %v399 = vunpack.c.l.b16 %v141
    %v400 = vunpack.c.h.b16 %v141
    %v401 = vunpack.c.l.b16 %v142
    %v402 = vunpack.c.h.b16 %v142
    %v403 = vunpack.c.l.b16 %v143
    %v404 = vunpack.c.h.b16 %v143
    %v405 = vunpack.c.l.b16 %v144
    %v406 = vunpack.c.h.b16 %v144
    %v407 = vunpack.c.l.b16 %v145
    %v408 = vunpack.c.h.b16 %v145
    %v409 = vunpack.c.l.b16 %v146
    %v410 = vunpack.c.h.b16 %v146
    %v411 = vunpack.c.l.b16 %v147
    %v412 = vunpack.c.h.b16 %v147
    %v413 = vunpack.c.l.b16 %v148
    %v414 = vunpack.c.h.b16 %v148
    %v415 = vunpack.c.l.b16 %v149
    %v416 = vunpack.c.h.b16 %v149
    %v417 = vunpack.c.l.b16 %v150
    %v418 = vunpack.c.h.b16 %v150
    %v419 = vunpack.c.l.b16 %v151
    %v420 = vunpack.c.h.b16 %v151
    %v421 = vunpack.c.l.b16 %v152
    %v422 = vunpack.c.h.b16 %v152
    %v423 = vunpack.c.l.b16 %v153
    %v424 = vunpack.c.h.b16 %v153
    %v425 = vunpack.c.l.b16 %v154
    %v426 = vunpack.c.h.b16 %v154
    %v427 = vunpack.c.l.b16 %v155
    %v428 = vunpack.c.h.b16 %v155
    %v429 = vunpack.c.l.b16 %v156
    %v430 = vunpack.c.h.b16 %v156
    %v431 = vunpack.c.l.b16 %v157
    %v432 = vunpack.c.h.b16 %v157
    %v433 = vunpack.c.l.b16 %v158
    %v434 = vunpack.c.h.b16 %v158
    %v435 = vunpack.c.l.b16 %v159
    %v436 = vunpack.c.h.b16 %v159
    %v437 = vunpack.c.l.b16 %v160
    %v438 = vunpack.c.h.b16 %v160
    %v439 = vunpack.c.l.b16 %v161
    %v440 = vunpack.c.h.b16 %v161
    %v441 = vunpack.c.l.b16 %v162
    %v442 = vunpack.c.h.b16 %v162
    %v443 = vunpack.c.l.b16 %v163
    %v444 = vunpack.c.h.b16 %v163
    %v445 = vunpack.c.l.b16 %v164
    %v446 = vunpack.c.h.b16 %v164
    %v447 = vunpack.c.l.b16 %v165
    %v448 = vunpack.c.h.b16 %v165
    %v449 = vunpack.c.l.b16 %v166
    %v450 = vunpack.c.h.b16 %v166
    %v451 = vunpack.c.l.b16 %v167
    %v452 = vunpack.c.h.b16 %v167
    %v453 = vunpack.c.l.b16 %v168
    %v454 = vunpack.c.h.b16 %v168
    %v455 = vunpack.c.l.b16 %v169
    %v456 = vunpack.c.h.b16 %v169
    %v457 = vunpack.c.l.b16 %v170
    %v458 = vunpack.c.h.b16 %v170
    %v459 = vunpack.c.l.b16 %v171
    %v460 = vunpack.c.h.b16 %v171
    %v461 = vunpack.c.l.b16 %v172
    %v462 = vunpack.c.h.b16 %v172
    %v463 = vunpack.c.l.b16 %v173
    %v464 = vunpack.c.h.b16 %v173
    %v465 = vunpack.c.l.b16 %v174
    %v466 = vunpack.c.h.b16 %v174
    %v467 = vunpack.c.l.b16 %v175
    %v468 = vunpack.c.h.b16 %v175
    %v469 = vunpack.c.l.b16 %v176
    %v470 = vunpack.c.h.b16 %v176
    %v471 = vunpack.c.l.b16 %v177
    %v472 = vunpack.c.h.b16 %v177
    %v473 = vunpack.c.l.b16 %v178
    %v474 = vunpack.c.h.b16 %v178
    %v475 = vunpack.c.l.b16 %v179
    %v476 = vunpack.c.h.b16 %v179
    %v477 = vunpack.c.l.b16 %v180
    %v478 = vunpack.c.h.b16 %v180
    %v479 = vunpack.c.l.b16 %v181
    %v480 = vunpack.c.h.b16 %v181
    %v481 = vunpack.c.l.b16 %v182
    %v482 = vunpack.c.h.b16 %v182
    %v483 = vunpack.c.l.b16 %v183
    %v484 = vunpack.c.h.b16 %v183
    %v485 = vunpack.c.l.b16 %v184
    %v486 = vunpack.c.h.b16 %v184
    %v487 = vunpack.c.l.b16 %v185
    %v488 = vunpack.c.h.b16 %v185
    %v489 = vunpack.c.l.b16 %v186
    %v490 = vunpack.c.h.b16 %v186
    %v491 = vunpack.c.l.b16 %v187
    %v492 = vunpack.c.h.b16 %v187
    %v493 = vunpack.c.l.b16 %v188
    %v494 = vunpack.c.h.b16 %v188
    %v495 = vunpack.c.l.b16 %v189
    %v496 = vunpack.c.h.b16 %v189
    %v497 = vunpack.c.l.b16 %v190
    %v498 = vunpack.c.h.b16 %v190
    %v499 = vunpack.c.l.b16 %v191
    %v500 = vunpack.c.h.b16 %v191
    %v501 = vunpack.c.l.b16 %v192
    %v502 = vunpack.c.h.b16 %v192
    %v503 = vunpack.c.l.b16 %v193
    %v504 = vunpack.c.h.b16 %v193
    %v505 = vunpack.c.l.b16 %v194
    %v506 = vunpack.c.h.b16 %v194
    %v507 = vunpack.c.l.b16 %v195
    %v508 = vunpack.c.h.b16 %v195
    %v509 = vunpack.c.l.b16 %v196
    %v510 = vunpack.c.h.b16 %v196
    %v511 = vunpack.c.l.b16 %v197
    %v512 = vunpack.c.h.b16 %v197
    %v513 = vunpack.c.l.b16 %v198
    %v514 = vunpack.c.h.b16 %v198
    %v515 = vunpack.c.l.b16 %v199
    %v516 = vunpack.c.h.b16 %v199
    %v517 = vunpack.c.l.b16 %v200
    %v518 = vunpack.c.h.b16 %v200
    %v519 = vunpack.c.l.b16 %v201
    %v520 = vunpack.c.h.b16 %v201
    %v521 = vunpack.c.l.b16 %v202
    %v522 = vunpack.c.h.b16 %v202
    %v523 = vunpack.c.l.b16 %v203
    %v524 = vunpack.c.h.b16 %v203
    %v525 = vunpack.c.l.b16 %v204
    %v526 = vunpack.c.h.b16 %v204
    %v527 = vunpack.c.l.b16 %v205
    %v528 = vunpack.c.h.b16 %v205
    %v529 = vunpack.c.l.b16 %v206
    %v530 = vunpack.c.h.b16 %v206
    %v531 = vunpack.c.l.b16 %v207
    %v532 = vunpack.c.h.b16 %v207
    %v533 = vunpack.c.l.b16 %v208
    %v534 = vunpack.c.h.b16 %v208
    %v535 = vunpack.c.l.b16 %v209
    %v536 = vunpack.c.h.b16 %v209
    %v537 = vunpack.c.l.b16 %v210
    %v538 = vunpack.c.h.b16 %v210
    %v539 = vunpack.c.l.b16 %v211
    %v540 = vunpack.c.h.b16 %v211
    %v541 = vunpack.c.l.b16 %v212
    %v542 = vunpack.c.h.b16 %v212
    %v543 = vunpack.c.l.b16 %v213
    %v544 = vunpack.c.h.b16 %v213
    %v545 = vunpack.c.l.b16 %v214
    %v546 = vunpack.c.h.b16 %v214
    %v547 = vunpack.c.l.b16 %v215
    %v548 = vunpack.c.h.b16 %v215
    %v549 = vunpack.c.l.b16 %v216
    %v550 = vunpack.c.h.b16 %v216
    %v551 = vunpack.c.l.b16 %v217
    %v552 = vunpack.c.h.b16 %v217
    %v553 = vunpack.c.l.b16 %v218
    %v554 = vunpack.c.h.b16 %v218
    %v555 = vunpack.c.l.b16 %v219
    %v556 = vunpack.c.h.b16 %v219
    %v557 = vunpack.c.l.b16 %v220
    %v558 = vunpack.c.h.b16 %v220
    %v559 = vunpack.c.l.b16 %v221
    %v560 = vunpack.c.h.b16 %v221
    %v561 = vunpack.c.l.b16 %v222
    %v562 = vunpack.c.h.b16 %v222
    %v563 = vpack.c.b16 %v377, %v371
    %v564 = vpack.c.b16 %v378, %v372
    %v565 = vpack.c.b16 %v379, %v373
    %v566 = vpack.c.b16 %v380, %v374
    %v567 = vpack.c.b16 %v381, %v375
    %v568 = vpack.c.b16 %v382, %v376
    %v569 = vpack.c.b16 %v389, %v383
    %v570 = vpack.c.b16 %v390, %v384
    %v571 = vpack.c.b16 %v391, %v385
    %v572 = vpack.c.b16 %v392, %v386
    %v573 = vpack.c.b16 %v393, %v387
    %v574 = vpack.c.b16 %v394, %v388
    %v575 = vpack.c.b16 %v401, %v395
    %v576 = vpack.c.b16 %v402, %v396
    %v577 = vpack.c.b16 %v403, %v397
    %v578 = vpack.c.b16 %v404, %v398
    %v579 = vpack.c.b16 %v405, %v399
    %v580 = vpack.c.b16 %v406, %v400
    %v581 = vpack.c.b16 %v413, %v407
    %v582 = vpack.c.b16 %v414, %v408
    %v583 = vpack.c.b16 %v415, %v409
    %v584 = vpack.c.b16 %v416, %v410
    %v585 = vpack.c.b16 %v417, %v411
    %v586 = vpack.c.b16 %v418, %v412
    %v587 = vpack.c.b16 %v425, %v419
    %v588 = vpack.c.b16 %v426, %v420
    %v589 = vpack.c.b16 %v427, %v421
    %v590 = vpack.c.b16 %v428, %v422
    %v591 = vpack.c.b16 %v429, %v423
    %v592 = vpack.c.b16 %v430, %v424
    %v593 = vpack.c.b16 %v437, %v431
    %v594 = vpack.c.b16 %v438, %v432
    %v595 = vpack.c.b16 %v439, %v433
    %v596 = vpack.c.b16 %v440, %v434
    %v597 = vpack.c.b16 %v441, %v435
    %v598 = vpack.c.b16 %v442, %v436
    %v599 = vpack.c.b16 %v449, %v443
    %v600 = vpack.c.b16 %v450, %v444
    %v601 = vpack.c.b16 %v451, %v445
    %v602 = vpack.c.b16 %v452, %v446
    %v603 = vpack.c.b16 %v453, %v447
    %v604 = vpack.c.b16 %v454, %v448
    %v605 = vpack.c.b16 %v461, %v455
    %v606 = vpack.c.b16 %v462, %v456
    %v607 = vpack.c.b16 %v463, %v457
    %v608 = vpack.c.b16 %v464, %v458
    %v609 = vpack.c.b16 %v465, %v459
    %v610 = vpack.c.b16 %v466, %v460
    %v611 = vpack.c.b16 %v473, %v467
    %v612 = vpack.c.b16 %v474, %v468
    %v613 = vpack.c.b16 %v475, %v469
    %v614 = vpack.c.b16 %v476, %v470
    %v615 = vpack.c.b16 %v477, %v471
    %v616 = vpack.c.b16 %v478, %v472
    %v617 = vpack.c.b16 %v485, %v479
    %v618 = vpack.c.b16 %v486, %v480
    %v619 = vpack.c.b16 %v487, %v481
    %v620 = vpack.c.b16 %v488, %v482
    %v621 = vpack.c.b16 %v489, %v483
    %v622 = vpack.c.b16 %v490, %v484
    %v623 = vpack.c.b16 %v497, %v491
    %v624 = vpack.c.b16 %v498, %v492
    %v625 = vpack.c.b16 %v499, %v493
    %v626 = vpack.c.b16 %v500, %v494
    %v627 = vpack.c.b16 %v501, %v495
    %v628 = vpack.c.b16 %v502, %v496
    %v629 = vpack.c.b16 %v509, %v503
    %v630 = vpack.c.b16 %v510, %v504
    %v631 = vpack.c.b16 %v511, %v505
    %v632 = vpack.c.b16 %v512, %v506
    %v633 = vpack.c.b16 %v513, %v507
    %v634 = vpack.c.b16 %v514, %v508
    %v635 = vpack.c.b16 %v521, %v515
    %v636 = vpack.c.b16 %v522, %v516
    %v637 = vpack.c.b16 %v523, %v517
    %v638 = vpack.c.b16 %v524, %v518
    %v639 = vpack.c.b16 %v525, %v519
    %v640 = vpack.c.b16 %v526, %v520
    %v641 = vpack.c.b16 %v533, %v527
    %v642 = vpack.c.b16 %v534, %v528
    %v643 = vpack.c.b16 %v535, %v529
    %v644 = vpack.c.b16 %v536, %v530
    %v645 = vpack.c.b16 %v537, %v531
    %v646 = vpack.c.b16 %v538, %v532
    %v647 = vpack.c.b16 %v545, %v539
    %v648 = vpack.c.b16 %v546, %v540
    %v649 = vpack.c.b16 %v547, %v541
    %v650 = vpack.c.b16 %v548, %v542
    %v651 = vpack.c.b16 %v549, %v543
    %v652 = vpack.c.b16 %v550, %v544
    %v653 = vpack.c.b16 %v557, %v551
    %v654 = vpack.c.b16 %v558, %v552
    %v655 = vpack.c.b16 %v559, %v553
    %v656 = vpack.c.b16 %v560, %v554
    %v657 = vpack.c.b16 %v561, %v555
    %v658 = vpack.c.b16 %v562, %v556
    %755 = vmatprep.subr.bf16.mxu0 %v606
    %756 = vmatpush1.bf16.msra.mxu0 %v605
    %757 = vmatprep.subr.bf16.mxu0 %v600
    %758 = vmatpush1.bf16.msra.mxu0 %v599
    %759 = vmatprep.subr.bf16.mxu0 %v594
    %760 = vmatpush1.bf16.msra.mxu0 %v593
    %761 = vmatprep.subr.bf16.mxu0 %v588
    %762 = vmatpush1.bf16.msra.mxu0 %v587
    %763 = vmatprep.subr.bf16.mxu0 %v582
    %764 = vmatpush1.bf16.msra.mxu0 %v581
    %765 = vmatprep.subr.bf16.mxu0 %v576
    %766 = vmatpush1.bf16.msra.mxu0 %v575
    %767 = vmatprep.subr.bf16.mxu0 %v570
    %768 = vmatpush1.bf16.msra.mxu0 %v569
    %769 = vmatprep.subr.bf16.mxu0 %v564
    %770 = vmatpush1.bf16.msra.mxu0 %v563
    %771 = vmatprep.subr.bf16.mxu0 %v654
    %772 = vmatpush2.bf16.msra.mxu0 %v653
    %773 = vmatprep.subr.bf16.mxu0 %v648
    %774 = vmatpush2.bf16.msra.mxu0 %v647
    %775 = vmatprep.subr.bf16.mxu0 %v642
    %776 = vmatpush2.bf16.msra.mxu0 %v641
    %777 = vmatprep.subr.bf16.mxu0 %v636
    %778 = vmatpush2.bf16.msra.mxu0 %v635
    %779 = vmatprep.subr.bf16.mxu0 %v630
    %780 = vmatpush2.bf16.msra.mxu0 %v629
    %781 = vmatprep.subr.bf16.mxu0 %v624
    %782 = vmatpush2.bf16.msra.mxu0 %v623
    %783 = vmatprep.subr.bf16.mxu0 %v618
    %784 = vmatpush2.bf16.msra.mxu0 %v617
    %785 = vmatprep.subr.bf16.mxu0 %v612
    %786 = vmatpush2.bf16.msra.mxu0 %v611
    %787 = vmatprep.mubr.bf16.mxu0 %v268
    %788 = vmatmul.mubr.bf16.gmra.mxu0 %v267
    %v789 = vpop.f32.mrf.mxu0
    %v790 = vadd.f32 %v228, %v789
    %v791 = vpop.f32.mrf.mxu0
    %v792 = vadd.f32 %v232, %v791
    %v793 = vpop.f32.mrf.mxu0
    %v794 = vadd.f32 %v228, %v793
    %v795 = vpop.f32.mrf.mxu0
    %v796 = vadd.f32 %v232, %v795
    %797 = vmatprep.mubr.bf16.mxu0 %v270
    %798 = vmatmul.mubr.bf16.gmra.mxu0 %v269
    %v799 = vpop.f32.mrf.mxu0
    %v800 = vadd.f32 %v228, %v799
    %v801 = vpop.f32.mrf.mxu0
    %v802 = vadd.f32 %v232, %v801
    %v803 = vpop.f32.mrf.mxu0
    %v804 = vadd.f32 %v228, %v803
    %v805 = vpop.f32.mrf.mxu0
    %v806 = vadd.f32 %v232, %v805
    %807 = vdwg.mxu0
    %808 = vmatprep.subr.bf16.mxu0 %v608
    %809 = vmatpush1.bf16.msra.mxu0 %v607
    %810 = vmatprep.subr.bf16.mxu0 %v602
    %811 = vmatpush1.bf16.msra.mxu0 %v601
    %812 = vmatprep.subr.bf16.mxu0 %v596
    %813 = vmatpush1.bf16.msra.mxu0 %v595
    %814 = vmatprep.subr.bf16.mxu0 %v590
    %815 = vmatpush1.bf16.msra.mxu0 %v589
    %816 = vmatprep.subr.bf16.mxu0 %v584
    %817 = vmatpush1.bf16.msra.mxu0 %v583
    %818 = vmatprep.subr.bf16.mxu0 %v578
    %819 = vmatpush1.bf16.msra.mxu0 %v577
    %820 = vmatprep.subr.bf16.mxu0 %v572
    %821 = vmatpush1.bf16.msra.mxu0 %v571
    %822 = vmatprep.subr.bf16.mxu0 %v566
    %823 = vmatpush1.bf16.msra.mxu0 %v565
    %824 = vmatprep.subr.bf16.mxu0 %v656
    %825 = vmatpush2.bf16.msra.mxu0 %v655
    %826 = vmatprep.subr.bf16.mxu0 %v650
    %827 = vmatpush2.bf16.msra.mxu0 %v649
    %828 = vmatprep.subr.bf16.mxu0 %v644
    %829 = vmatpush2.bf16.msra.mxu0 %v643
    %830 = vmatprep.subr.bf16.mxu0 %v638
    %831 = vmatpush2.bf16.msra.mxu0 %v637
    %832 = vmatprep.subr.bf16.mxu0 %v632
    %833 = vmatpush2.bf16.msra.mxu0 %v631
    %834 = vmatprep.subr.bf16.mxu0 %v626
    %835 = vmatpush2.bf16.msra.mxu0 %v625
    %836 = vmatprep.subr.bf16.mxu0 %v620
    %837 = vmatpush2.bf16.msra.mxu0 %v619
    %838 = vmatprep.subr.bf16.mxu0 %v614
    %839 = vmatpush2.bf16.msra.mxu0 %v613
    %840 = vmatprep.mubr.bf16.mxu0 %v268
    %841 = vmatmul.mubr.bf16.gmra.mxu0 %v267
    %v842 = vpop.f32.mrf.mxu0
    %v843 = vadd.f32 %v236, %v842
    %v844 = vpop.f32.mrf.mxu0
    %v845 = vadd.f32 %v240, %v844
    %v846 = vpop.f32.mrf.mxu0
    %v847 = vadd.f32 %v236, %v846
    %v848 = vpop.f32.mrf.mxu0
    %v849 = vadd.f32 %v240, %v848
    %850 = vmatprep.mubr.bf16.mxu0 %v270
    %851 = vmatmul.mubr.bf16.gmra.mxu0 %v269
    %v852 = vpop.f32.mrf.mxu0
    %v853 = vadd.f32 %v236, %v852
    %v854 = vpop.f32.mrf.mxu0
    %v855 = vadd.f32 %v240, %v854
    %v856 = vpop.f32.mrf.mxu0
    %v857 = vadd.f32 %v236, %v856
    %v858 = vpop.f32.mrf.mxu0
    %v859 = vadd.f32 %v240, %v858
    %860 = vdwg.mxu0
    %861 = vmatprep.subr.bf16.mxu0 %v610
    %862 = vmatpush1.bf16.msra.mxu0 %v609
    %863 = vmatprep.subr.bf16.mxu0 %v604
    %864 = vmatpush1.bf16.msra.mxu0 %v603
    %865 = vmatprep.subr.bf16.mxu0 %v598
    %866 = vmatpush1.bf16.msra.mxu0 %v597
    %867 = vmatprep.subr.bf16.mxu0 %v592
    %868 = vmatpush1.bf16.msra.mxu0 %v591
    %869 = vmatprep.subr.bf16.mxu0 %v586
    %870 = vmatpush1.bf16.msra.mxu0 %v585
    %871 = vmatprep.subr.bf16.mxu0 %v580
    %872 = vmatpush1.bf16.msra.mxu0 %v579
    %873 = vmatprep.subr.bf16.mxu0 %v574
    %874 = vmatpush1.bf16.msra.mxu0 %v573
    %875 = vmatprep.subr.bf16.mxu0 %v568
    %876 = vmatpush1.bf16.msra.mxu0 %v567
    %877 = vmatprep.subr.bf16.mxu0 %v658
    %878 = vmatpush2.bf16.msra.mxu0 %v657
    %879 = vmatprep.subr.bf16.mxu0 %v652
    %880 = vmatpush2.bf16.msra.mxu0 %v651
    %881 = vmatprep.subr.bf16.mxu0 %v646
    %882 = vmatpush2.bf16.msra.mxu0 %v645
    %883 = vmatprep.subr.bf16.mxu0 %v640
    %884 = vmatpush2.bf16.msra.mxu0 %v639
    %885 = vmatprep.subr.bf16.mxu0 %v634
    %886 = vmatpush2.bf16.msra.mxu0 %v633
    %887 = vmatprep.subr.bf16.mxu0 %v628
    %888 = vmatpush2.bf16.msra.mxu0 %v627
    %889 = vmatprep.subr.bf16.mxu0 %v622
    %890 = vmatpush2.bf16.msra.mxu0 %v621
    %891 = vmatprep.subr.bf16.mxu0 %v616
    %892 = vmatpush2.bf16.msra.mxu0 %v615
    %893 = vmatprep.mubr.bf16.mxu0 %v268
    %894 = vmatmul.mubr.bf16.gmra.mxu0 %v267
    %v895 = vpop.f32.mrf.mxu0
    %v896 = vadd.f32 %v244, %v895
    %v897 = vpop.f32.mrf.mxu0
    %v898 = vadd.f32 %v248, %v897
    %v899 = vpop.f32.mrf.mxu0
    %v900 = vadd.f32 %v244, %v899
    %v901 = vpop.f32.mrf.mxu0
    %v902 = vadd.f32 %v248, %v901
    %903 = vmatprep.mubr.bf16.mxu0 %v270
    %904 = vmatmul.mubr.bf16.gmra.mxu0 %v269
    %v905 = vpop.f32.mrf.mxu0
    %v906 = vadd.f32 %v244, %v905
    %v907 = vpop.f32.mrf.mxu0
    %v908 = vadd.f32 %v248, %v907
    %v909 = vpop.f32.mrf.mxu0
    %v910 = vadd.f32 %v244, %v909
    %v911 = vpop.f32.mrf.mxu0
    %v912 = vadd.f32 %v248, %v911
    %913 = vdwg.mxu0
    %v914 = vpack.c.bf16 %v794, %v790
    %v915 = vpack.c.bf16 %v796, %v792
    %v916 = vpack.c.bf16 %v847, %v843
    %v917 = vpack.c.bf16 %v849, %v845
    %v918 = vpack.c.bf16 %v900, %v896
    %v919 = vpack.c.bf16 %v902, %v898
    %v920 = vpack.c.bf16 %v804, %v800
    %v921 = vpack.c.bf16 %v806, %v802
    %v922 = vpack.c.bf16 %v857, %v853
    %v923 = vpack.c.bf16 %v859, %v855
    %v924 = vpack.c.bf16 %v910, %v906
    %v925 = vpack.c.bf16 %v912, %v908
    %v938 = vunpack.c.l.b16 %v914
    %v939 = vunpack.c.l.b16 %v915
    %v940 = vunpack.c.l.b16 %v916
    %v941 = vunpack.c.l.b16 %v917
    %v942 = vunpack.c.l.b16 %v918
    %v943 = vunpack.c.l.b16 %v919
    %v944 = vunpack.c.h.b16 %v914
    %v945 = vunpack.c.h.b16 %v915
    %v946 = vunpack.c.h.b16 %v916
    %v947 = vunpack.c.h.b16 %v917
    %v948 = vunpack.c.h.b16 %v918
    %v949 = vunpack.c.h.b16 %v919
    %v950 = vunpack.c.l.b16 %v920
    %v951 = vunpack.c.l.b16 %v921
    %v952 = vunpack.c.l.b16 %v922
    %v953 = vunpack.c.l.b16 %v923
    %v954 = vunpack.c.l.b16 %v924
    %v955 = vunpack.c.l.b16 %v925
    %v956 = vunpack.c.h.b16 %v920
    %v957 = vunpack.c.h.b16 %v921
    %v958 = vunpack.c.h.b16 %v922
    %v959 = vunpack.c.h.b16 %v923
    %v960 = vunpack.c.h.b16 %v924
    %v961 = vunpack.c.h.b16 %v925
    %v962 = vpack.c.b16 %v939, %v938
    %v963 = vpack.c.b16 %v941, %v940
    %v964 = vpack.c.b16 %v943, %v942
    %v965 = vpack.c.b16 %v945, %v944
    %v966 = vpack.c.b16 %v947, %v946
    %v967 = vpack.c.b16 %v949, %v948
    %v968 = vpack.c.b16 %v951, %v950
    %v969 = vpack.c.b16 %v953, %v952
    %v970 = vpack.c.b16 %v955, %v954
    %v971 = vpack.c.b16 %v957, %v956
    %v972 = vpack.c.b16 %v959, %v958
    %v973 = vpack.c.b16 %v961, %v960
    %986 = vst [vmem:[#allocation3] sm:$0xff] %v962
    %987 = vst [vmem:[#allocation3 + $0x8] sm:$0xff] %v963
    %vm988 = vcmask 1043456
    %vm989 = vcmask 523268
    %vm990 = vmor %vm989, %vm988
    %991 = vst.msk [vmem:[#allocation3 + $0x10] sm:$0xff] %vm990, %v964
    %992 = vst [vmem:[#allocation3 + $0x18] sm:$0xff] %v965
    %993 = vst [vmem:[#allocation3 + $0x20] sm:$0xff] %v966
    %994 = vst.msk [vmem:[#allocation3 + $0x28] sm:$0xff] %vm990, %v967
    %995 = vst [vmem:[#allocation3 + $0x30] sm:$0xff] %v968
    %996 = vst [vmem:[#allocation3 + $0x38] sm:$0xff] %v969
    %997 = vst.msk [vmem:[#allocation3 + $0x40] sm:$0xff] %vm990, %v970
    %998 = vst [vmem:[#allocation3 + $0x48] sm:$0xff] %v971
    %999 = vst [vmem:[#allocation3 + $0x50] sm:$0xff] %v972
    %1000 = vst.msk [vmem:[#allocation3 + $0x58] sm:$0xff] %vm990, %v973
    // Predicated region
    $region22: #{tpu_custom_call.1} parent=1 // pred_check
      _
    $region23: #{tpu_custom_call.1} parent=1 // pred_check_branch
      %1002 = sbr.rel (0) target = $region25
    $region24: #{tpu_custom_call.1} parent=1 // pred_region
      %s1004 = ssub.s32 1536, 1536
      %1005 = vsyncadd [#allocation4], %s1004
      %s1006 = sshll.u32 [#allocation3], 4
      %s1007 = int_to_ptr.vmem [resolvable:$true] %s1006
      %1012 = dma.vmem_to_hbm [thread:$0]  %s1007, 1536, %s4, [#allocation4], 384, 384, 24
    $region25: #{tpu_custom_call.1} parent=1 // pred_fallthru
      _
    // Predicated region
    $region26: #{tpu_custom_call.1} parent=1 // pred_check
      _
    $region27: #{tpu_custom_call.1} parent=1 // pred_check_branch
      %1014 = sbr.rel (0) target = $region29
    $region28: #{tpu_custom_call.1} parent=1 // pred_region
      %1015 = dma.done [#allocation4], 1536
    $region29: #{tpu_custom_call.1} parent=1 // pred_fallthru
      _
    %1016 = vsyncpa [#allocation4], 1

</llo_original>
